<compile_context>
chip_gen: v5e
topology: v5e:2x2
jax: 0.10.0
libtpu: 0.0.40
codegen_flags: <defaults>
</compile_context>

<pallas_src>
import jax
import jax.numpy as jnp
from jax.experimental import pallas as pl
from jax.experimental.pallas import tpu as pltpu


def avgpool_global_add(x3, x2):
    """x3: (N, C, H3, W3), x2: (N, C, H2, W2) -> (N, C, H2, W2)."""
    N, C, H3, W3 = x3.shape
    N2, C2, H2, W2 = x2.shape
    assert (N, C) == (N2, C2), "batch/channel dims must match for the add"

    NC = N * C
    area = H3 * W3          # true pooling area (63)
    s2 = H2 * W2            # output spatial size (195)

    LANE, SUB = 128, 8
    nc_pad = -(-NC // SUB) * SUB          # sublane-aligned row count
    s3_pad = -(-area // LANE) * LANE      # lane-dense x3 slab width
    s2_pad = -(-s2 // LANE) * LANE        # lane-dense output slab width

    # Build (8,128)-aligned, zero-padded slabs. Zero padding keeps the mean
    # exact because we divide by the true area, not the padded width.
    x3_p = jnp.zeros((nc_pad, s3_pad), x3.dtype).at[:NC, :area].set(
        x3.reshape(NC, area))
    x2_p = jnp.zeros((nc_pad, s2_pad), x2.dtype).at[:NC, :s2].set(
        x2.reshape(NC, s2))

    inv_area = float(1.0 / area)

    def kernel(x3_ref, x2_ref, o_ref):
        x3v = x3_ref[...]
        if x3v.dtype != jnp.float32:          # keep f32 accumulation for bf16
            x3v = x3v.astype(jnp.float32)
        # Global average pool: row-wise sum over the (zero-padded) spatial
        # axis, scaled by the trace-time constant 1/true_area.
        pooled = jnp.sum(x3v, axis=-1, keepdims=True) * jnp.float32(inv_area)

        x2v = x2_ref[...]
        if x2v.dtype != jnp.float32:
            x2v = x2v.astype(jnp.float32)
        o_ref[...] = (x2v + pooled).astype(o_ref.dtype)

    out_p = pl.pallas_call(
        kernel,
        out_shape=jax.ShapeDtypeStruct((nc_pad, s2_pad), x2.dtype),
        in_specs=[
            pl.BlockSpec(memory_space=pltpu.MemorySpace.VMEM),
            pl.BlockSpec(memory_space=pltpu.MemorySpace.VMEM),
        ],
        out_specs=pl.BlockSpec(memory_space=pltpu.MemorySpace.VMEM),
        input_output_aliases={1: 0},   # reuse x2_p's HBM buffer as the output
    )(x3_p, x2_p)

    return out_p[:NC, :s2].reshape(N, C, H2, W2)


if __name__ == "__main__":
    key = jax.random.PRNGKey(0)
    k1, k2 = jax.random.split(key)

    # Shapes implied by the module's forward (x2 channels set to 3 so the
    # broadcast-add is well-defined).
    x3 = jax.random.normal(k1, (1, 3, 9, 7), dtype=jnp.float32)
    x2 = jax.random.normal(k2, (1, 3, 15, 13), dtype=jnp.float32)

    out = avgpool_global_add(x3, x2)
    out = jax.block_until_ready(out)

    # Pure-JAX reference check.
    ref = x2 + jnp.mean(x3, axis=(2, 3), keepdims=True)
    assert out.shape == (1, 3, 15, 13)
    assert jnp.allclose(out, ref, atol=1e-5, rtol=1e-5), "mismatch vs reference"

    print("KERNEL_OK")
</pallas_src>

<mosaic_0001>
module attributes {stable_mosaic.version = 11 : i64} {
  func.func @kernel(%arg0: memref<8x128xf32, #tpu.memory_space<vmem>>, %arg1: memref<8x256xf32, #tpu.memory_space<vmem>>, %arg2: memref<8x256xf32, #tpu.memory_space<vmem>>) attributes {dimension_semantics = [], scalar_prefetch = 0 : i64, scratch_operands = 0 : i64, tpu.core_type = #tpu.core_type<tc>} {
    %c0 = arith.constant 0 : index
    %c0_0 = arith.constant 0 : index
    %0 = vector.load %arg0[%c0, %c0_0] : memref<8x128xf32, #tpu.memory_space<vmem>>, vector<8x128xf32>
    %cst = arith.constant dense<0.000000e+00> : vector<8xf32>
    %1 = vector.multi_reduction <add>, %0, %cst [1] : vector<8x128xf32> to vector<8xf32>
    %2 = vector.shape_cast %1 : vector<8xf32> to vector<8x1xf32>
    %cst_1 = arith.constant 0.0158730168 : f32
    %3 = vector.broadcast %cst_1 : f32 to vector<8x1xf32>
    %4 = arith.mulf %2, %3 : vector<8x1xf32>
    %c0_2 = arith.constant 0 : index
    %c0_3 = arith.constant 0 : index
    %5 = vector.load %arg1[%c0_2, %c0_3] : memref<8x256xf32, #tpu.memory_space<vmem>>, vector<8x256xf32>
    %6 = vector.broadcast %4 : vector<8x1xf32> to vector<8x256xf32>
    %7 = arith.addf %5, %6 : vector<8x256xf32>
    %c0_4 = arith.constant 0 : index
    %c0_5 = arith.constant 0 : index
    %8 = vector.load %arg2[%c0_4, %c0_5] : memref<8x256xf32, #tpu.memory_space<vmem>>, vector<8x256xf32>
    tpu.vector_store %arg2[%c0_4, %c0_5], %7 {strides = array<i32>} : memref<8x256xf32, #tpu.memory_space<vmem>>, vector<8x256xf32>,
    return
  }
}

</mosaic_0001>

<llo_original>
// kernel: tpu_custom_call.1
$region0: #{tpu_custom_call.1}
  #allocation0 [shape = 'u32[]', space=smem, size = 0x4, offset = 0x4, fixed_abs, tag = 'smem constant byte address 0x4 - core index']
  #allocation1 [shape = 'u32[72,128]{1,0:T(1,128)}', space=vmem, size = 0x9000, scoped, tag = 'internal scratch']
  %s0 = inlined_call_operand.vmem [shape: f32[8,128], index: 0, kind: input, shape index: {}]
  %s1 = inlined_call_operand.hbm [shape: f32[8,256], index: 1, kind: input, shape index: {}, may-alias: {1,2}]
  %s2 = inlined_call_operand.hbm [shape: f32[8,256], index: 2, kind: output, shape index: {}, may-alias: {1,2}]
  %s3 = sld [smem:[#allocation0]]
  $region22: #{tpu_custom_call.1} parent=0
    _
  %s5 = ssub.s32 1, %s3
  %s6 = scalar_select 0, %s5, %s3
  $region1: #{tpu_custom_call.1} parent=0
    #allocation2 [shape = 'u8[8192]{0}', space=vmem, size = 0x2000, scoped, tag = 'input window, operand 1, single buffered']
    #allocation3 [shape = 's32[1]{0}', space=sflag, size = 0x4, scoped, tag = 'scoped memory for tpu_custom_call.1']
    #allocation4 [shape = 's32[1]{0}', space=sflag, size = 0x4, scoped, tag = 'scoped memory for tpu_custom_call.1']
    #allocation5 [shape = 'u8[8192]{0}', space=vmem, size = 0x2000, scoped, tag = 'output window, operand 0, single buffered']
    %7 = vsyncpa [#allocation3], 0
    %8 = vsyncpa [#allocation4], 0
    // Predicated region
    $region2: #{tpu_custom_call.1} parent=1 // pred_check
      _
    $region3: #{tpu_custom_call.1} parent=1 // pred_check_branch
      %10 = sbr.rel (0) target = $region5
    $region4: #{tpu_custom_call.1} parent=1 // pred_region
      _
    $region5: #{tpu_custom_call.1} parent=1 // pred_fallthru
      _
    // Predicated region
    $region6: #{tpu_custom_call.1} parent=1 // pred_check
      _
    $region7: #{tpu_custom_call.1} parent=1 // pred_check_branch
      %12 = sbr.rel (0) target = $region9
    $region8: #{tpu_custom_call.1} parent=1 // pred_region
      %14 = vsyncadd [#allocation3], 0
      %s16 = sshll.u32 %s1, 4
      %s17 = int_to_ptr.hbm [resolvable:$true] %s16
      %s18 = sshll.u32 [#allocation2], 4
      %s19 = int_to_ptr.vmem [resolvable:$true] %s18
      %21 = dma.hbm_to_vmem [thread:$0]  %s17, 256, %s19, [#allocation3]
    $region9: #{tpu_custom_call.1} parent=1 // pred_fallthru
      _
    // Predicated region
    $region10: #{tpu_custom_call.1} parent=1 // pred_check
      _
    $region11: #{tpu_custom_call.1} parent=1 // pred_check_branch
      %23 = sbr.rel (0) target = $region13
    $region12: #{tpu_custom_call.1} parent=1 // pred_region
      %25 = dma.done [#allocation3], 256
    $region13: #{tpu_custom_call.1} parent=1 // pred_fallthru
      _
    %v26 = vld [vmem:[%s0] sm:$0xff]
    %27 = vadd.xlane.f32.xlu0 %v26
    %v28 = vpop.xlane.xlu0 %27
    %v29 = vmul.f32 %v28, 0.015873017
    %v30 = vld [vmem:[#allocation2] sm:$0xff]
    %v31 = vld [vmem:[#allocation2 + $0x8] sm:$0xff]
    %v32 = vadd.f32 %v30, %v29
    %v33 = vadd.f32 %v31, %v29
    %34 = vst [vmem:[#allocation5] sm:$0xff] %v32
    %35 = vst [vmem:[#allocation5 + $0x8] sm:$0xff] %v33
    // Predicated region
    $region14: #{tpu_custom_call.1} parent=1 // pred_check
      _
    $region15: #{tpu_custom_call.1} parent=1 // pred_check_branch
      %37 = sbr.rel (0) target = $region17
    $region16: #{tpu_custom_call.1} parent=1 // pred_region
      %39 = vsyncadd [#allocation4], 0
      %s41 = sshll.u32 [#allocation5], 4
      %s42 = int_to_ptr.vmem [resolvable:$true] %s41
      %s43 = sshll.u32 %s2, 4
      %s44 = int_to_ptr.hbm [resolvable:$true] %s43
      %46 = dma.vmem_to_hbm [thread:$0]  %s42, 256, %s44, [#allocation4]
    $region17: #{tpu_custom_call.1} parent=1 // pred_fallthru
      _
    // Predicated region
    $region18: #{tpu_custom_call.1} parent=1 // pred_check
      _
    $region19: #{tpu_custom_call.1} parent=1 // pred_check_branch
      %48 = sbr.rel (0) target = $region21
    $region20: #{tpu_custom_call.1} parent=1 // pred_region
      %50 = dma.done [#allocation4], 256
    $region21: #{tpu_custom_call.1} parent=1 // pred_fallthru
      _
    %51 = vsyncpa [#allocation3], 1
    %52 = vsyncpa [#allocation4], 1

</llo_original>
